<compile_context>
chip_gen: v5e
topology: v5e:2x2
jax: 0.10.0
libtpu: 0.0.40
codegen_flags: <defaults>
</compile_context>

<pallas_src>
import functools

import jax
import jax.numpy as jnp
from jax import lax
from jax.experimental import pallas as pl
from jax.experimental.pallas import tpu as pltpu


def _round_up(x, m):
    return -(-x // m) * m


def _pow_static(base, gamma):
    """base**gamma with integer gamma lowered to plain VPU multiplies."""
    g = float(gamma)
    if g.is_integer() and g >= 0:
        gi = int(g)
        if gi == 0:
            return jnp.ones_like(base)
        out = base
        for _ in range(gi - 1):
            out = out * base
        return out
    return jnp.power(base, g)  # base is clamped >= 0 by the caller


def _focal_kernel(preds_ref, labels_ref, alpha_ref, out_ref, *, gamma, n_rows):
    # preds_ref : (C, tn)  logits, classes on sublanes, rows on lanes (native dtype)
    # labels_ref: (1, tn)  int32 class index per row (lane-dense)
    # alpha_ref : (C, 1)   f32 per-class alpha weights (resident every step)
    # out_ref   : (1, 128) f32; lane 0 holds this tile's partial loss sum
    C, tn = preds_ref.shape

    x = preds_ref[...].astype(jnp.float32)                   # (C, tn)
    lbl = labels_ref[...]                                     # (1, tn) int32
    alpha = alpha_ref[...].astype(jnp.float32)                # (C, 1)

    # log-softmax pieces over the class (sublane) axis; no full logp temp.
    m = jnp.max(x, axis=0, keepdims=True)                     # (1, tn)
    shifted = x - m                                           # (C, tn)
    s = jnp.sum(jnp.exp(shifted), axis=0, keepdims=True)      # (1, tn)

    # one-hot "gather" of the label class along the sublane axis.
    # NOTE: out-of-range labels yield loss 0 here (one-hot never matches),
    # whereas torch.gather would read clamped/garbage values.
    class_ids = lax.broadcasted_iota(jnp.int32, (C, tn), 0)
    onehot = class_ids == lbl                                  # (C, tn) bool

    shifted_t = jnp.sum(jnp.where(onehot, shifted, 0.0), axis=0, keepdims=True)
    logpt = shifted_t - jnp.log(s)                             # (1, tn)
    a_t = jnp.sum(jnp.where(onehot, alpha, 0.0), axis=0, keepdims=True)
    pt = jnp.exp(logpt)                                        # (1, tn), EUP

    base = jnp.maximum(1.0 - pt, 0.0)                          # clamp: no NaN from pow
    focal = _pow_static(base, gamma)

    # focal loss per row: -alpha_t * (1 - p_t)^gamma * log(p_t)
    loss_rows = a_t * (-focal * logpt)                         # (1, tn)

    # Mask rows beyond the (unpadded) input, then reduce this tile to a scalar.
    row_idx = pl.program_id(0) * tn + lax.broadcasted_iota(jnp.int32, (1, tn), 1)
    loss_rows = jnp.where(row_idx < n_rows, loss_rows, 0.0)
    partial = jnp.sum(loss_rows, axis=1, keepdims=True)        # (1, 1)

    lane = lax.broadcasted_iota(jnp.int32, (1, 128), 1)
    out_ref[...] = jnp.where(lane == 0, partial, 0.0).astype(out_ref.dtype)


def focal_loss(preds, labels, alpha, *, gamma=2, size_average=True,
               tn=65536, class_major=False):
    """Focal loss forward.

    preds : (..., C) logits (any float dtype), or (C, N) if class_major=True.
    labels: (...,) integer class ids (flattened to N rows).
    alpha : (C,) per-class weights.
    """
    if class_major:
        preds_t = preds                                   # already (C, N)
        C, N = preds_t.shape
    else:
        C = preds.shape[-1]
        preds2d = preds.reshape(-1, C)                    # keep native dtype
        N = preds2d.shape[0]
        # TODO(synk): this transpose is the one remaining wrapper-side HBM pass;
        # produce class-major logits upstream and pass class_major=True to drop it.
        preds_t = preds2d.T                               # (C, N)

    labels_row = labels.reshape(1, -1).astype(jnp.int32)  # (1, N), no padding
    alpha_col = alpha.reshape(C, 1).astype(jnp.float32)   # (C, 1)

    itemsize = jnp.dtype(preds_t.dtype).itemsize

    # --- VMEM accounting (sublane-padding aware) -------------------------------
    sub_pack = max(8, 32 // itemsize)                     # f32->8, bf16->16, int8->32
    c_dma = _round_up(C, sub_pack)                        # sublanes of one logits tile
    c8 = _round_up(C, 8)
    per_row_bytes = (
        2 * (c_dma * itemsize + 8 * 4)                    # double-buffered logits + labels
        + 3 * c8 * 4                                      # f32 (C, tn) working slabs
        + 6 * 8 * 4                                       # (1, tn) f32/i32 temporaries
    )
    try:
        vmem_cap = int(pltpu.get_tpu_info().vmem_capacity_bytes)
    except Exception:
        vmem_cap = 64 << 20                               # conservative (v7x-sized)
    vmem_limit = int(min(vmem_cap // 2, 64 << 20))        # 64 MiB v5e/v6e, 32 MiB v7x
    tile_budget = max(4 << 20, vmem_limit - (6 << 20))    # headroom for output/scratch

    # --- tile size: multiple of 128 lanes, >=2 tiles for v7x megacore ----------
    tn = max(128, _round_up(min(int(tn), _round_up(N, 128)), 128))
    tn = min(tn, max(128, _round_up(-(-N // 2), 128)))    # keep both v7x TCs busy
    while tn > 128 and tn * per_row_bytes > tile_budget:
        tn = _round_up(tn // 2, 128)

    num_tiles = -(-N // tn)

    kernel = functools.partial(_focal_kernel, gamma=gamma, n_rows=N)

    partials = pl.pallas_call(
        kernel,
        out_shape=jax.ShapeDtypeStruct((1, num_tiles * 128), jnp.float32),
        grid_spec=pltpu.PrefetchScalarGridSpec(
            num_scalar_prefetch=0,
            grid=(num_tiles,),
            in_specs=[
                pl.BlockSpec((C, tn), lambda i: (0, i)),   # logits tile (ragged tail ok)
                pl.BlockSpec((1, tn), lambda i: (0, i)),   # labels tile (lane-dense)
                pl.BlockSpec((C, 1), lambda i: (0, 0)),    # alpha (resident)
            ],
            out_specs=pl.BlockSpec((1, 128), lambda i: (0, i)),  # per-tile partial sum
        ),
        compiler_params=pltpu.CompilerParams(
            dimension_semantics=("parallel",),             # no carried state
            vmem_limit_bytes=vmem_limit,
        ),
        cost_estimate=pl.CostEstimate(
            flops=int(N * (6 * C + 10)),
            transcendentals=int(N * (C + 2)),
            bytes_accessed=int(N * (C * itemsize + 4) + num_tiles * 128 * 4 + C * 4),
        ),
    )(preds_t, labels_row, alpha_col)

    total = jnp.sum(partials)                              # num_tiles non-zero lanes
    if size_average:
        return total / jnp.float32(N)
    return total


def _make_alpha(num_classes, alpha_scalar=0.25):
    # Deterministic init matching the PyTorch __init__ (scalar alpha branch).
    a = jnp.zeros((num_classes,), jnp.float32)
    a = a.at[0].add(alpha_scalar)
    a = a.at[1:].add(1.0 - alpha_scalar)
    return a


def _reference(preds, labels, alpha, gamma=2, size_average=True):
    C = preds.shape[-1]
    x = preds.reshape(-1, C).astype(jnp.float32)
    lbl = labels.reshape(-1)
    p = jax.nn.softmax(x, axis=1)
    logp = jnp.log(p)
    pt = jnp.take_along_axis(p, lbl[:, None], axis=1)[:, 0]
    logpt = jnp.take_along_axis(logp, lbl[:, None], axis=1)[:, 0]
    a_t = alpha[lbl]
    loss = a_t * (-jnp.power(1.0 - pt, float(gamma)) * logpt)
    return loss.mean() if size_average else loss.sum()


if __name__ == "__main__":
    num_classes = 4
    batch, seq = 2, 8          # N = 16 rows after flattening
    gamma = 2

    key = jax.random.PRNGKey(0)
    k1, k2 = jax.random.split(key)
    preds = jax.random.normal(k1, (batch, seq, num_classes), jnp.float32)
    labels = jax.random.randint(k2, (batch, seq), 0, num_classes, jnp.int32)
    alpha = _make_alpha(num_classes, 0.25)

    out = focal_loss(preds, labels, alpha, gamma=gamma, size_average=True)
    out = jax.block_until_ready(out)

    ref = _reference(preds, labels, alpha, gamma=gamma, size_average=True)
    assert jnp.allclose(out, ref, rtol=1e-5, atol=1e-5), (out, ref)
    print("KERNEL_OK")
</pallas_src>

<mosaic_0001>
module attributes {stable_mosaic.version = 11 : i64} {
  func.func @_focal_kernel(%arg0: i32, %arg1: memref<4x128xf32, #tpu.memory_space<vmem>>, %arg2: memref<1x128xi32, #tpu.memory_space<vmem>>, %arg3: memref<4x1xf32, #tpu.memory_space<vmem>>, %arg4: memref<1x128xf32, #tpu.memory_space<vmem>>) attributes {dimension_semantics = [#tpu.dimension_semantics<parallel>], iteration_bounds = array<i64: 1>, scalar_prefetch = 0 : i64, scratch_operands = 0 : i64, tpu.core_type = #tpu.core_type<tc>, window_params = [{transform_indices = @transform_0, window_bounds = array<i64: 4, 128>}, {transform_indices = @transform_1, window_bounds = array<i64: 1, 128>}, {pipeline_mode = #tpu.pipeline_mode<synchronous>, transform_indices = @transform_2, window_bounds = array<i64: 4, 1>}, {transform_indices = @transform_3, window_bounds = array<i64: 1, 128>}]} {
    %c0 = arith.constant 0 : index
    %c0_0 = arith.constant 0 : index
    %0 = vector.load %arg1[%c0, %c0_0] : memref<4x128xf32, #tpu.memory_space<vmem>>, vector<4x128xf32>
    %c0_1 = arith.constant 0 : index
    %c0_2 = arith.constant 0 : index
    %1 = vector.load %arg2[%c0_1, %c0_2] : memref<1x128xi32, #tpu.memory_space<vmem>>, vector<1x128xi32>
    %c0_3 = arith.constant 0 : index
    %c0_4 = arith.constant 0 : index
    %2 = vector.load %arg3[%c0_3, %c0_4] : memref<4x1xf32, #tpu.memory_space<vmem>>, vector<4x1xf32>
    %cst = arith.constant dense<0xFF800000> : vector<128xf32>
    %3 = vector.multi_reduction <maximumf>, %0, %cst [0] : vector<4x128xf32> to vector<128xf32>
    %4 = vector.shape_cast %3 : vector<128xf32> to vector<1x128xf32>
    %5 = vector.broadcast %4 : vector<1x128xf32> to vector<4x128xf32>
    %6 = arith.subf %0, %5 : vector<4x128xf32>
    %7 = math.exp %6 : vector<4x128xf32>
    %cst_5 = arith.constant dense<0.000000e+00> : vector<128xf32>
    %8 = vector.multi_reduction <add>, %7, %cst_5 [0] : vector<4x128xf32> to vector<128xf32>
    %9 = vector.shape_cast %8 : vector<128xf32> to vector<1x128xf32>
    %10 = tpu.iota {dimensions = array<i32: 0>} : vector<4x128xi32>
    %11 = vector.broadcast %1 : vector<1x128xi32> to vector<4x128xi32>
    %12 = arith.cmpi eq, %10, %11 : vector<4x128xi32>
    %cst_6 = arith.constant 0.000000e+00 : f32
    %13 = vector.broadcast %cst_6 : f32 to vector<4x128xf32>
    %14 = arith.select %12, %6, %13 : vector<4x128xi1>, vector<4x128xf32>
    %cst_7 = arith.constant dense<0.000000e+00> : vector<128xf32>
    %15 = vector.multi_reduction <add>, %14, %cst_7 [0] : vector<4x128xf32> to vector<128xf32>
    %16 = vector.shape_cast %15 : vector<128xf32> to vector<1x128xf32>
    %17 = math.log %9 : vector<1x128xf32>
    %18 = arith.subf %16, %17 : vector<1x128xf32>
    %cst_8 = arith.constant 0.000000e+00 : f32
    %19 = vector.shape_cast %2 : vector<4x1xf32> to vector<4x1xf32>
    %20 = vector.broadcast %19 : vector<4x1xf32> to vector<4x128xf32>
    %21 = vector.broadcast %cst_8 : f32 to vector<4x128xf32>
    %22 = arith.select %12, %20, %21 : vector<4x128xi1>, vector<4x128xf32>
    %cst_9 = arith.constant dense<0.000000e+00> : vector<128xf32>
    %23 = vector.multi_reduction <add>, %22, %cst_9 [0] : vector<4x128xf32> to vector<128xf32>
    %24 = vector.shape_cast %23 : vector<128xf32> to vector<1x128xf32>
    %25 = math.exp %18 : vector<1x128xf32>
    %cst_10 = arith.constant 1.000000e+00 : f32
    %26 = vector.broadcast %cst_10 : f32 to vector<1x128xf32>
    %27 = arith.subf %26, %25 : vector<1x128xf32>
    %cst_11 = arith.constant 0.000000e+00 : f32
    %28 = vector.broadcast %cst_11 : f32 to vector<1x128xf32>
    %29 = arith.maximumf %27, %28 : vector<1x128xf32>
    %30 = arith.mulf %29, %29 : vector<1x128xf32>
    %cst_12 = arith.constant 0.000000e+00 : f32
    %31 = vector.broadcast %cst_12 : f32 to vector<1x128xf32>
    %32 = arith.subf %31, %30 : vector<1x128xf32>
    %33 = arith.mulf %32, %18 : vector<1x128xf32>
    %34 = arith.mulf %24, %33 : vector<1x128xf32>
    %c128_i32 = arith.constant 128 : i32
    %35 = arith.muli %arg0, %c128_i32 : i32
    %36 = tpu.iota {dimensions = array<i32: 1>} : vector<1x128xi32>
    %37 = vector.broadcast %35 : i32 to vector<1x128xi32>
    %38 = arith.addi %37, %36 : vector<1x128xi32>
    %c16_i32 = arith.constant 16 : i32
    %39 = vector.broadcast %c16_i32 : i32 to vector<1x128xi32>
    %40 = arith.cmpi slt, %38, %39 : vector<1x128xi32>
    %cst_13 = arith.constant 0.000000e+00 : f32
    %41 = vector.broadcast %cst_13 : f32 to vector<1x128xf32>
    %42 = arith.select %40, %34, %41 : vector<1x128xi1>, vector<1x128xf32>
    %cst_14 = arith.constant dense<0.000000e+00> : vector<1xf32>
    %43 = vector.multi_reduction <add>, %42, %cst_14 [1] : vector<1x128xf32> to vector<1xf32>
    %44 = vector.shape_cast %43 : vector<1xf32> to vector<1x1xf32>
    %45 = tpu.iota {dimensions = array<i32: 1>} : vector<1x128xi32>
    %c0_i32 = arith.constant 0 : i32
    %46 = vector.broadcast %c0_i32 : i32 to vector<1x128xi32>
    %47 = arith.cmpi eq, %45, %46 : vector<1x128xi32>
    %cst_15 = arith.constant 0.000000e+00 : f32
    %48 = vector.shape_cast %44 : vector<1x1xf32> to vector<1x1xf32>
    %49 = vector.broadcast %48 : vector<1x1xf32> to vector<1x128xf32>
    %50 = vector.broadcast %cst_15 : f32 to vector<1x128xf32>
    %51 = arith.select %47, %49, %50 : vector<1x128xi1>, vector<1x128xf32>
    %c0_16 = arith.constant 0 : index
    %c0_17 = arith.constant 0 : index
    %52 = vector.load %arg4[%c0_16, %c0_17] : memref<1x128xf32, #tpu.memory_space<vmem>>, vector<1x128xf32>
    tpu.vector_store %arg4[%c0_16, %c0_17], %51 {strides = array<i32>} : memref<1x128xf32, #tpu.memory_space<vmem>>, vector<1x128xf32>,
    return
  }
  func.func @transform_0(%arg0: i32) -> (i32, i32) {
    %c0_i32 = arith.constant 0 : i32
    %c0_i32_0 = arith.constant 0 : i32
    return %c0_i32, %arg0 : i32, i32
  }
  func.func @transform_1(%arg0: i32) -> (i32, i32) {
    %c0_i32 = arith.constant 0 : i32
    %c0_i32_0 = arith.constant 0 : i32
    return %c0_i32, %arg0 : i32, i32
  }
  func.func @transform_2(%arg0: i32) -> (i32, i32) {
    %c0_i32 = arith.constant 0 : i32
    %c0_i32_0 = arith.constant 0 : i32
    %c0_i32_1 = arith.constant 0 : i32
    return %c0_i32, %c0_i32_0 : i32, i32
  }
  func.func @transform_3(%arg0: i32) -> (i32, i32) {
    %c0_i32 = arith.constant 0 : i32
    %c0_i32_0 = arith.constant 0 : i32
    return %c0_i32, %arg0 : i32, i32
  }
}

</mosaic_0001>

<llo_original>
// kernel: tpu_custom_call.1
$region0: #{tpu_custom_call.1}
  #allocation0 [shape = 'u32[]', space=smem, size = 0x4, offset = 0x4, fixed_abs, tag = 'smem constant byte address 0x4 - core index']
  #allocation1 [shape = 'u32[72,128]{1,0:T(1,128)}', space=vmem, size = 0x9000, scoped, tag = 'internal scratch']
  %s0 = inlined_call_operand.vmem [shape: f32[4,16], index: 0, kind: input, shape index: {}]
  %s1 = inlined_call_operand.vmem [shape: s32[1,16], index: 1, kind: input, shape index: {}]
  %s2 = inlined_call_operand.vmem [shape: f32[4,1], index: 2, kind: input, shape index: {}]
  %s3 = inlined_call_operand.hbm [shape: f32[1,128], index: 3, kind: output, shape index: {}]
  %s4 = sld [smem:[#allocation0]]
  $region22: #{tpu_custom_call.1} parent=0
    _
  %s6 = ssub.s32 1, %s4
  %s7 = scalar_select 0, %s6, %s4
  $region1: #{tpu_custom_call.1} parent=0
    #allocation2 [shape = 'u8[512]{0}', space=vmem, size = 0x400, scoped, tag = 'output window, operand 0, single buffered']
    #allocation3 [shape = 's32[1]{0}', space=sflag, size = 0x4, scoped, tag = 'scoped memory for tpu_custom_call.1']
    %8 = vsyncpa [#allocation3], 0
    // Predicated region
    $region2: #{tpu_custom_call.1} parent=1 // pred_check
      _
    $region3: #{tpu_custom_call.1} parent=1 // pred_check_branch
      %10 = sbr.rel (0) target = $region5
    $region4: #{tpu_custom_call.1} parent=1 // pred_region
      _
    $region5: #{tpu_custom_call.1} parent=1 // pred_fallthru
      _
    // Predicated region
    $region6: #{tpu_custom_call.1} parent=1 // pred_check
      _
    $region7: #{tpu_custom_call.1} parent=1 // pred_check_branch
      %12 = sbr.rel (0) target = $region9
    $region8: #{tpu_custom_call.1} parent=1 // pred_region
      _
    $region9: #{tpu_custom_call.1} parent=1 // pred_fallthru
      _
    // Predicated region
    $region10: #{tpu_custom_call.1} parent=1 // pred_check
      _
    $region11: #{tpu_custom_call.1} parent=1 // pred_check_branch
      %14 = sbr.rel (0) target = $region13
    $region12: #{tpu_custom_call.1} parent=1 // pred_region
      _
    $region13: #{tpu_custom_call.1} parent=1 // pred_fallthru
      _
    %v15 = vld [vmem:[%s0] sm:$0xf]
    %v16 = vld [vmem:[%s1] sm:$0x1]
    %v17 = vld [vmem:[%s2] sm:$0xf]
    %vm18 = vcmask 1043456
    %v19 = vsel %vm18, %v15, -inf
    %v20 = vrot.slane %v19, 4
    %v21 = vmax.f32 %v19, %v20
    %v22 = vrot.slane %v21, 2
    %v23 = vmax.f32 %v21, %v22
    %v24 = vrot.slane %v23, 1
    %v25 = vmax.f32 %v23, %v24
    %v26 = vsub.f32 %v15, %v25
    %v27 = vmul.f32 %v26, 1.442695
    %v28 = vpow.pop %v27
    %v29 = vsel %vm18, %v28, 0.0
    %v30 = vrot.slane %v29, 4
    %v31 = vadd.f32 %v29, %v30
    %v32 = vrot.slane %v31, 2
    %v33 = vadd.f32 %v31, %v32
    %v34 = vrot.slane %v33, 1
    %v35 = vadd.f32 %v33, %v34
    %v36 = vlaneseq
    %v37 = vshrl.u32 %v36, 7
    %v38 = vperm.slane %v16, 0
    %vm39 = vcmp.eq.s32.totalorder %v37, %v38
    %v40 = vsel %vm39, %v26, 0.0
    %v41 = vsel %vm18, %v40, 0.0
    %v42 = vrot.slane %v41, 4
    %v43 = vadd.f32 %v41, %v42
    %v44 = vrot.slane %v43, 2
    %v45 = vadd.f32 %v43, %v44
    %v46 = vrot.slane %v45, 1
    %v47 = vadd.f32 %v45, %v46
    %v48 = vlog2.pop %v35
    %v49 = vmul.f32 %v48, 0.6931472
    %v50 = vsub.f32 %v47, %v49
    %52 = vset.pattern.permute.xlu0 0
    %53 = vperm.xlu0 %52, %v17
    %v54 = vpop.permute.xlu0 %53
    %v56 = vsel %vm39, %v54, 0.0
    %v57 = vsel %vm18, %v56, 0.0
    %v58 = vrot.slane %v57, 4
    %v59 = vadd.f32 %v57, %v58
    %v60 = vrot.slane %v59, 2
    %v61 = vadd.f32 %v59, %v60
    %v62 = vrot.slane %v61, 1
    %v63 = vadd.f32 %v61, %v62
    %v64 = vmul.f32 %v50, 1.442695
    %v65 = vpow.pop %v64
    %v66 = vsub.f32 1.0, %v65
    %v67 = vmax.f32 %v66, 0.0
    %v68 = vmul.f32 %v67, %v67
    %v69 = vsub.f32 0.0, %v68
    %v70 = vmul.f32 %v69, %v50
    %v71 = vmul.f32 %v63, %v70
    %s72 = smul.u32 0, 128
    %v73 = vlaneseq
    %v74 = vand.u32 %v73, 127
    %v75 = vstv %s72
    %v76 = vadd.s32 %v75, %v74
    %vm77 = vcmp.lt.s32.totalorder %v76, 16
    %v78 = vsel %vm77, %v71, 0.0
    %79 = vadd.xlane.f32.xlu0 %v78
    %v80 = vpop.xlane.xlu0 %79
    %vm81 = vcmp.eq.s32.totalorder %v74, 0
    %v82 = vsel %vm81, %v80, 0.0
    %83 = vst [vmem:[#allocation2] sm:$0x1] %v82
    // Predicated region
    $region14: #{tpu_custom_call.1} parent=1 // pred_check
      _
    $region15: #{tpu_custom_call.1} parent=1 // pred_check_branch
      %85 = sbr.rel (0) target = $region17
    $region16: #{tpu_custom_call.1} parent=1 // pred_region
      %87 = vsyncadd [#allocation3], 0
      %s89 = sshll.u32 [#allocation2], 4
      %s90 = int_to_ptr.vmem [resolvable:$true] %s89
      %s91 = sshll.u32 %s3, 4
      %s92 = int_to_ptr.hbm [resolvable:$true] %s91
      %94 = dma.vmem_to_hbm [thread:$0]  %s90, 16, %s92, [#allocation3]
    $region17: #{tpu_custom_call.1} parent=1 // pred_fallthru
      _
    // Predicated region
    $region18: #{tpu_custom_call.1} parent=1 // pred_check
      _
    $region19: #{tpu_custom_call.1} parent=1 // pred_check_branch
      %96 = sbr.rel (0) target = $region21
    $region20: #{tpu_custom_call.1} parent=1 // pred_region
      %98 = dma.done [#allocation3], 16
    $region21: #{tpu_custom_call.1} parent=1 // pred_fallthru
      _
    %99 = vsyncpa [#allocation3], 1

</llo_original>
